<compile_context>
chip_gen: v7x
topology: tpu7x:2x2x1
jax: 0.10.0
libtpu: 0.0.40
codegen_flags: <defaults>
</compile_context>

<pallas_src>
import jax
import jax.numpy as jnp
from jax.experimental import pallas as pl
from jax.experimental.pallas import tpu as pltpu

# Model / problem sizes (forced by Linear(32*10*10, 20): spatial must be 10x10).
B, CIN, H, W = 2, 3, 10, 10
C1, C2 = 16, 32
KH = KW = 3
OUT = 20
FEATS = CIN * H * W        # 300
K_PAD = 512                # 2 clean 256-wide MXU K-tiles (v6e/v7x), 4x128 (v5e)
N_PAD = 128                # lane-dense output -> unmasked stores


def simple_kernel(x_ref, w_ref, out_ref):
    # x_ref  : (B, 512)   bf16, flattened NCHW input, zero-padded along K
    # w_ref  : (512, 128) bf16, pre-folded + zero-padded conv1∘conv2∘linear weight
    # out_ref: (B, 128)   f32  (cols 20..127 are zero; sliced off in the wrapper)
    out_ref[...] = jnp.dot(x_ref[...], w_ref[...],
                           preferred_element_type=jnp.float32)


def fold_weights(w1_oihw, w2_oihw, wl_pt):
    """One-time (init-time) composition of conv1, conv2 and linear into a single
    padded (K_PAD, N_PAD) bf16 matrix such that
        out = (x.reshape(B, -1) padded to K_PAD) @ W
    matches the PyTorch forward exactly (same NCHW flatten order) on the first
    OUT output columns.  Pad entries are zeros."""
    dn = ("NCHW", "OIHW", "NCHW")
    hi = jax.lax.Precision.HIGHEST
    # Identity basis over the flattened input space, viewed as NCHW images.
    eye = jnp.eye(FEATS, dtype=jnp.float32).reshape(FEATS, CIN, H, W)
    h1 = jax.lax.conv_general_dilated(
        eye, w1_oihw.astype(jnp.float32), (1, 1), ((1, 1), (1, 1)),
        dimension_numbers=dn, precision=hi)
    h2 = jax.lax.conv_general_dilated(
        h1, w2_oihw.astype(jnp.float32), (1, 1), ((1, 1), (1, 1)),
        dimension_numbers=dn, precision=hi)
    # (300, 3200) @ (3200, 20) -> (300, 20)
    w_folded = jnp.dot(h2.reshape(FEATS, -1), wl_pt.T.astype(jnp.float32),
                       precision=hi)
    # Zero-pad to the MXU-friendly (512, 128) slab and cast to bf16.
    w_pad = jnp.zeros((K_PAD, N_PAD), jnp.float32).at[:FEATS, :OUT].set(w_folded)
    return w_pad.astype(jnp.bfloat16)


@jax.jit
def simple_forward(x_nchw, w_folded_padded):
    """x_nchw: (B, 3, 10, 10) any float dtype; w_folded_padded: (512, 128) bf16."""
    b = x_nchw.shape[0]
    # NCHW flatten is a contiguous view; pad + cast fuse into one tiny XLA op.
    x_flat = x_nchw.reshape(b, FEATS).astype(jnp.bfloat16)
    x_pad = jnp.pad(x_flat, ((0, 0), (0, K_PAD - FEATS)))
    out_padded = pl.pallas_call(
        simple_kernel,
        out_shape=jax.ShapeDtypeStruct((b, N_PAD), jnp.float32),
        in_specs=[pl.BlockSpec(memory_space=pltpu.MemorySpace.VMEM),
                  pl.BlockSpec(memory_space=pltpu.MemorySpace.VMEM)],
        out_specs=pl.BlockSpec(memory_space=pltpu.MemorySpace.VMEM),
        cost_estimate=pl.CostEstimate(
            flops=2 * b * K_PAD * N_PAD,
            bytes_accessed=b * K_PAD * 2 + K_PAD * N_PAD * 2 + b * N_PAD * 4,
            transcendentals=0),
    )(x_pad, w_folded_padded)
    return out_padded[:, :OUT]


def reference_forward(x_nchw, w1_oihw, w2_oihw, wl_pt):
    """Pure-JAX reference mirroring the PyTorch module exactly (NCHW, f32)."""
    dn = ("NCHW", "OIHW", "NCHW")
    hi = jax.lax.Precision.HIGHEST
    h1 = jax.lax.conv_general_dilated(
        x_nchw, w1_oihw, (1, 1), ((1, 1), (1, 1)),
        dimension_numbers=dn, precision=hi)
    h2 = jax.lax.conv_general_dilated(
        h1, w2_oihw, (1, 1), ((1, 1), (1, 1)),
        dimension_numbers=dn, precision=hi)
    return jnp.dot(h2.reshape(x_nchw.shape[0], -1), wl_pt.T, precision=hi)


if __name__ == "__main__":
    key = jax.random.PRNGKey(0)
    kx, k1, k2, k3 = jax.random.split(key, 4)

    # Deterministic synthetic parameters (shapes from the module __init__).
    x = jax.random.normal(kx, (B, CIN, H, W), jnp.float32)
    w1 = jax.random.normal(k1, (C1, CIN, KH, KW), jnp.float32) * 0.10
    w2 = jax.random.normal(k2, (C2, C1, KH, KW), jnp.float32) * 0.05
    wl = jax.random.normal(k3, (OUT, C2 * H * W), jnp.float32) * 0.02

    # One-time weight composition + padding (init-time, not in the per-call path).
    w_folded = jax.block_until_ready(fold_weights(w1, w2, wl))
    assert w_folded.shape == (K_PAD, N_PAD) and w_folded.dtype == jnp.bfloat16

    out = simple_forward(x, w_folded)
    out = jax.block_until_ready(out)

    ref = reference_forward(x, w1, w2, wl)
    assert out.shape == (B, OUT)
    assert jnp.allclose(out, ref, rtol=5e-3, atol=5e-3), (
        f"max abs err = {jnp.max(jnp.abs(out - ref))}")

    print("KERNEL_OK")
</pallas_src>

<mosaic_0001>
module attributes {stable_mosaic.version = 11 : i64} {
  func.func @simple_kernel(%arg0: memref<2x512xbf16, #tpu.memory_space<vmem>>, %arg1: memref<512x128xbf16, #tpu.memory_space<vmem>>, %arg2: memref<2x128xf32, #tpu.memory_space<vmem>>) attributes {dimension_semantics = [], scalar_prefetch = 0 : i64, scratch_operands = 0 : i64, tpu.core_type = #tpu.core_type<tc>} {
    %c0 = arith.constant 0 : index
    %c0_0 = arith.constant 0 : index
    %0 = vector.load %arg0[%c0, %c0_0] : memref<2x512xbf16, #tpu.memory_space<vmem>>, vector<2x512xbf16>
    %c0_1 = arith.constant 0 : index
    %c0_2 = arith.constant 0 : index
    %1 = vector.load %arg1[%c0_1, %c0_2] : memref<512x128xbf16, #tpu.memory_space<vmem>>, vector<512x128xbf16>
    %cst = arith.constant dense<0.000000e+00> : vector<2x128xf32>
    %2 = tpu.matmul %0, %1, %cst {dimension_numbers = #tpu.dot_dimension_numbers<[1], [0], [0], [1], [0, 0, 1, 1], [], []>} : vector<2x512xbf16>, vector<512x128xbf16>, vector<2x128xf32> -> vector<2x128xf32>
    %c0_3 = arith.constant 0 : index
    %c0_4 = arith.constant 0 : index
    %3 = vector.load %arg2[%c0_3, %c0_4] : memref<2x128xf32, #tpu.memory_space<vmem>>, vector<2x128xf32>
    tpu.vector_store %arg2[%c0_3, %c0_4], %2 {strides = array<i32>} : memref<2x128xf32, #tpu.memory_space<vmem>>, vector<2x128xf32>,
    return
  }
}

</mosaic_0001>

<llo_original>
// kernel: simple_forward.1
$region0: #{simple_forward.1}
  #allocation0 [shape = 'u32[]', space=smem, size = 0x4, offset = 0x4, fixed_abs, tag = 'smem constant byte address 0x4 - core index']
  #allocation1 [shape = 'u32[144,128]{1,0:T(1,128)}', space=vmem, size = 0x12000, scoped, tag = 'internal scratch']
  %s0 = inlined_call_operand.vmem [shape: bf16[2,512], index: 0, kind: input, shape index: {}]
  %s1 = inlined_call_operand.hbm [shape: bf16[512,128], index: 1, kind: input, shape index: {}]
  %s2 = inlined_call_operand.hbm [shape: f32[2,128], index: 2, kind: output, shape index: {}]
  %s3 = sld [smem:[#allocation0]]
  $region22: #{simple_forward.1} parent=0
    _
  %s5 = ssub.s32 1, %s3
  %s6 = scalar_select 0, %s5, %s3
  $region1: #{simple_forward.1} parent=0
    #allocation2 [shape = 'u8[131072]{0}', space=vmem, size = 0x20000, scoped, tag = 'input window, operand 1, single buffered']
    #allocation3 [shape = 's32[1]{0}', space=sflag, size = 0x4, scoped, tag = 'scoped memory for simple_forward.1']
    #allocation4 [shape = 's32[1]{0}', space=sflag, size = 0x4, scoped, tag = 'scoped memory for simple_forward.1']
    #allocation5 [shape = 'u8[1024]{0}', space=vmem, size = 0x400, scoped, tag = 'output window, operand 0, single buffered']
    %7 = vsyncpa [#allocation3], 0
    %8 = vsyncpa [#allocation4], 0
    // Predicated region
    $region2: #{simple_forward.1} parent=1 // pred_check
      _
    $region3: #{simple_forward.1} parent=1 // pred_check_branch
      %10 = sbr.rel (0) target = $region5
    $region4: #{simple_forward.1} parent=1 // pred_region
      _
    $region5: #{simple_forward.1} parent=1 // pred_fallthru
      _
    // Predicated region
    $region6: #{simple_forward.1} parent=1 // pred_check
      _
    $region7: #{simple_forward.1} parent=1 // pred_check_branch
      %12 = sbr.rel (0) target = $region9
    $region8: #{simple_forward.1} parent=1 // pred_region
      %s14 = ssub.s32 4096, 4096
      %15 = vsyncadd [#allocation3], %s14
      %s16 = sshll.u32 [#allocation2], 4
      %s17 = int_to_ptr.vmem [resolvable:$true] %s16
      %22 = dma.hbm_to_vmem [thread:$0]  %s1, 4096, %s17, [#allocation3], 64, 64, 4
    $region9: #{simple_forward.1} parent=1 // pred_fallthru
      _
    // Predicated region
    $region10: #{simple_forward.1} parent=1 // pred_check
      _
    $region11: #{simple_forward.1} parent=1 // pred_check_branch
      %24 = sbr.rel (0) target = $region13
    $region12: #{simple_forward.1} parent=1 // pred_region
      %25 = dma.done [#allocation3], 4096
    $region13: #{simple_forward.1} parent=1 // pred_fallthru
      _
    %v27 = vld [vmem:[%s0] sm:$0xf]
    %v28 = vld [vmem:[#allocation2] sm:$0xf]
    %v29 = vld [vmem:[#allocation2 + $0x4] sm:$0xf]
    %v30 = vld [vmem:[#allocation2 + $0x8] sm:$0xf]
    %v31 = vld [vmem:[#allocation2 + $0xc] sm:$0xf]
    %v32 = vld [vmem:[#allocation2 + $0x10] sm:$0xf]
    %v33 = vld [vmem:[#allocation2 + $0x14] sm:$0xf]
    %v34 = vld [vmem:[#allocation2 + $0x18] sm:$0xf]
    %v35 = vld [vmem:[#allocation2 + $0x1c] sm:$0xf]
    %v36 = vld [vmem:[#allocation2 + $0x20] sm:$0xf]
    %v37 = vld [vmem:[#allocation2 + $0x24] sm:$0xf]
    %v38 = vld [vmem:[#allocation2 + $0x28] sm:$0xf]
    %v39 = vld [vmem:[#allocation2 + $0x2c] sm:$0xf]
    %v40 = vld [vmem:[#allocation2 + $0x30] sm:$0xf]
    %v41 = vld [vmem:[#allocation2 + $0x34] sm:$0xf]
    %v42 = vld [vmem:[#allocation2 + $0x38] sm:$0xf]
    %v43 = vld [vmem:[#allocation2 + $0x3c] sm:$0xf]
    %v44 = vld [vmem:[#allocation2 + $0x40] sm:$0xf]
    %v45 = vld [vmem:[#allocation2 + $0x44] sm:$0xf]
    %v46 = vld [vmem:[#allocation2 + $0x48] sm:$0xf]
    %v47 = vld [vmem:[#allocation2 + $0x4c] sm:$0xf]
    %v48 = vld [vmem:[#allocation2 + $0x50] sm:$0xf]
    %v49 = vld [vmem:[#allocation2 + $0x54] sm:$0xf]
    %v50 = vld [vmem:[#allocation2 + $0x58] sm:$0xf]
    %v51 = vld [vmem:[#allocation2 + $0x5c] sm:$0xf]
    %v52 = vld [vmem:[#allocation2 + $0x60] sm:$0xf]
    %v53 = vld [vmem:[#allocation2 + $0x64] sm:$0xf]
    %v54 = vld [vmem:[#allocation2 + $0x68] sm:$0xf]
    %v55 = vld [vmem:[#allocation2 + $0x6c] sm:$0xf]
    %v56 = vld [vmem:[#allocation2 + $0x70] sm:$0xf]
    %v57 = vld [vmem:[#allocation2 + $0x74] sm:$0xf]
    %v58 = vld [vmem:[#allocation2 + $0x78] sm:$0xf]
    %v59 = vld [vmem:[#allocation2 + $0x7c] sm:$0xf]
    %v60 = vld [vmem:[#allocation2 + $0x80] sm:$0xf]
    %v61 = vld [vmem:[#allocation2 + $0x84] sm:$0xf]
    %v62 = vld [vmem:[#allocation2 + $0x88] sm:$0xf]
    %v63 = vld [vmem:[#allocation2 + $0x8c] sm:$0xf]
    %v64 = vld [vmem:[#allocation2 + $0x90] sm:$0xf]
    %v65 = vld [vmem:[#allocation2 + $0x94] sm:$0xf]
    %v66 = vld [vmem:[#allocation2 + $0x98] sm:$0xf]
    %v67 = vld [vmem:[#allocation2 + $0x9c] sm:$0xf]
    %v68 = vld [vmem:[#allocation2 + $0xa0] sm:$0xf]
    %v69 = vld [vmem:[#allocation2 + $0xa4] sm:$0xf]
    %v70 = vld [vmem:[#allocation2 + $0xa8] sm:$0xf]
    %v71 = vld [vmem:[#allocation2 + $0xac] sm:$0xf]
    %v72 = vld [vmem:[#allocation2 + $0xb0] sm:$0xf]
    %v73 = vld [vmem:[#allocation2 + $0xb4] sm:$0xf]
    %v74 = vld [vmem:[#allocation2 + $0xb8] sm:$0xf]
    %v75 = vld [vmem:[#allocation2 + $0xbc] sm:$0xf]
    %v76 = vld [vmem:[#allocation2 + $0xc0] sm:$0xf]
    %v77 = vld [vmem:[#allocation2 + $0xc4] sm:$0xf]
    %v78 = vld [vmem:[#allocation2 + $0xc8] sm:$0xf]
    %v79 = vld [vmem:[#allocation2 + $0xcc] sm:$0xf]
    %v80 = vld [vmem:[#allocation2 + $0xd0] sm:$0xf]
    %v81 = vld [vmem:[#allocation2 + $0xd4] sm:$0xf]
    %v82 = vld [vmem:[#allocation2 + $0xd8] sm:$0xf]
    %v83 = vld [vmem:[#allocation2 + $0xdc] sm:$0xf]
    %v84 = vld [vmem:[#allocation2 + $0xe0] sm:$0xf]
    %v85 = vld [vmem:[#allocation2 + $0xe4] sm:$0xf]
    %v86 = vld [vmem:[#allocation2 + $0xe8] sm:$0xf]
    %v87 = vld [vmem:[#allocation2 + $0xec] sm:$0xf]
    %v88 = vld [vmem:[#allocation2 + $0xf0] sm:$0xf]
    %v89 = vld [vmem:[#allocation2 + $0xf4] sm:$0xf]
    %v90 = vld [vmem:[#allocation2 + $0xf8] sm:$0xf]
    %v91 = vld [vmem:[#allocation2 + $0xfc] sm:$0xf]
    %v94 = vunpack.c.l.s4 1966171168
    %v95 = vunpack.c.0.s8 %v94
    %v96 = vlaneseq
    %v97 = vshrl.u32 %v96, 7
    %v98 = vsub.s32 %v95, %v97
    %v99 = vrot.slane %v27, %v98
    %v100 = vcombine.high %v99, %v99
    %v102 = vunpack.c.l.s4 1966171168
    %v103 = vunpack.c.0.s8 %v102
    %v104 = vlaneseq
    %v105 = vshrl.u32 %v104, 7
    %v106 = vsub.s32 %v103, %v105
    %v107 = vrot.slane %v99, %v106
    %v109 = vunpack.c.l.s4 1966171168
    %v110 = vunpack.c.0.s8 %v109
    %v111 = vlaneseq
    %v112 = vshrl.u32 %v111, 7
    %v113 = vsub.s32 %v110, %v112
    %v114 = vrot.slane %v100, %v113
    %v115 = vcombine.high %v107, %v107
    %v116 = vcombine.high %v114, %v114
    %v185 = vunpack.c.l.b16 %v28
    %v186 = vunpack.c.l.b16 %v29
    %v187 = vunpack.c.l.b16 %v30
    %v188 = vunpack.c.l.b16 %v31
    %v189 = vunpack.c.l.b16 %v32
    %v190 = vunpack.c.l.b16 %v33
    %v191 = vunpack.c.l.b16 %v34
    %v192 = vunpack.c.l.b16 %v35
    %v193 = vunpack.c.l.b16 %v36
    %v194 = vunpack.c.l.b16 %v37
    %v195 = vunpack.c.l.b16 %v38
    %v196 = vunpack.c.l.b16 %v39
    %v197 = vunpack.c.l.b16 %v40
    %v198 = vunpack.c.l.b16 %v41
    %v199 = vunpack.c.l.b16 %v42
    %v200 = vunpack.c.l.b16 %v43
    %v201 = vunpack.c.l.b16 %v44
    %v202 = vunpack.c.l.b16 %v45
    %v203 = vunpack.c.l.b16 %v46
    %v204 = vunpack.c.l.b16 %v47
    %v205 = vunpack.c.l.b16 %v48
    %v206 = vunpack.c.l.b16 %v49
    %v207 = vunpack.c.l.b16 %v50
    %v208 = vunpack.c.l.b16 %v51
    %v209 = vunpack.c.l.b16 %v52
    %v210 = vunpack.c.l.b16 %v53
    %v211 = vunpack.c.l.b16 %v54
    %v212 = vunpack.c.l.b16 %v55
    %v213 = vunpack.c.l.b16 %v56
    %v214 = vunpack.c.l.b16 %v57
    %v215 = vunpack.c.l.b16 %v58
    %v216 = vunpack.c.l.b16 %v59
    %v217 = vunpack.c.l.b16 %v60
    %v218 = vunpack.c.l.b16 %v61
    %v219 = vunpack.c.l.b16 %v62
    %v220 = vunpack.c.l.b16 %v63
    %v221 = vunpack.c.l.b16 %v64
    %v222 = vunpack.c.l.b16 %v65
    %v223 = vunpack.c.l.b16 %v66
    %v224 = vunpack.c.l.b16 %v67
    %v225 = vunpack.c.l.b16 %v68
    %v226 = vunpack.c.l.b16 %v69
    %v227 = vunpack.c.l.b16 %v70
    %v228 = vunpack.c.l.b16 %v71
    %v229 = vunpack.c.l.b16 %v72
    %v230 = vunpack.c.l.b16 %v73
    %v231 = vunpack.c.l.b16 %v74
    %v232 = vunpack.c.l.b16 %v75
    %v233 = vunpack.c.l.b16 %v76
    %v234 = vunpack.c.l.b16 %v77
    %v235 = vunpack.c.l.b16 %v78
    %v236 = vunpack.c.l.b16 %v79
    %v237 = vunpack.c.l.b16 %v80
    %v238 = vunpack.c.l.b16 %v81
    %v239 = vunpack.c.l.b16 %v82
    %v240 = vunpack.c.l.b16 %v83
    %v241 = vunpack.c.l.b16 %v84
    %v242 = vunpack.c.l.b16 %v85
    %v243 = vunpack.c.l.b16 %v86
    %v244 = vunpack.c.l.b16 %v87
    %v245 = vunpack.c.l.b16 %v88
    %v246 = vunpack.c.l.b16 %v89
    %v247 = vunpack.c.l.b16 %v90
    %v248 = vunpack.c.l.b16 %v91
    %v249 = vpack.c.b16 %v186, %v185
    %v250 = vpack.c.b16 %v188, %v187
    %v251 = vpack.c.b16 %v190, %v189
    %v252 = vpack.c.b16 %v192, %v191
    %v253 = vpack.c.b16 %v194, %v193
    %v254 = vpack.c.b16 %v196, %v195
    %v255 = vpack.c.b16 %v198, %v197
    %v256 = vpack.c.b16 %v200, %v199
    %v257 = vpack.c.b16 %v202, %v201
    %v258 = vpack.c.b16 %v204, %v203
    %v259 = vpack.c.b16 %v206, %v205
    %v260 = vpack.c.b16 %v208, %v207
    %v261 = vpack.c.b16 %v210, %v209
    %v262 = vpack.c.b16 %v212, %v211
    %v263 = vpack.c.b16 %v214, %v213
    %v264 = vpack.c.b16 %v216, %v215
    %v265 = vpack.c.b16 %v218, %v217
    %v266 = vpack.c.b16 %v220, %v219
    %v267 = vpack.c.b16 %v222, %v221
    %v268 = vpack.c.b16 %v224, %v223
    %v269 = vpack.c.b16 %v226, %v225
    %v270 = vpack.c.b16 %v228, %v227
    %v271 = vpack.c.b16 %v230, %v229
    %v272 = vpack.c.b16 %v232, %v231
    %v273 = vpack.c.b16 %v234, %v233
    %v274 = vpack.c.b16 %v236, %v235
    %v275 = vpack.c.b16 %v238, %v237
    %v276 = vpack.c.b16 %v240, %v239
    %v277 = vpack.c.b16 %v242, %v241
    %v278 = vpack.c.b16 %v244, %v243
    %v279 = vpack.c.b16 %v246, %v245
    %v280 = vpack.c.b16 %v248, %v247
    %313 = vmatprep.subr.bf16.mxu0 0
    %314 = vmatpush1.bf16.msra.mxu0 %v249
    %315 = vmatprep.subr.bf16.mxu0 0
    %316 = vmatpush1.bf16.msra.mxu0 %v250
    %317 = vmatprep.subr.bf16.mxu0 0
    %318 = vmatpush1.bf16.msra.mxu0 %v251
    %319 = vmatprep.subr.bf16.mxu0 0
    %320 = vmatpush1.bf16.msra.mxu0 %v252
    %321 = vmatprep.subr.bf16.mxu0 0
    %322 = vmatpush1.bf16.msra.mxu0 %v253
    %323 = vmatprep.subr.bf16.mxu0 0
    %324 = vmatpush1.bf16.msra.mxu0 %v254
    %325 = vmatprep.subr.bf16.mxu0 0
    %326 = vmatpush1.bf16.msra.mxu0 %v255
    %327 = vmatprep.subr.bf16.mxu0 0
    %328 = vmatpush1.bf16.msra.mxu0 %v256
    %329 = vmatprep.subr.bf16.mxu0 0
    %330 = vmatpush1.bf16.msra.mxu0 %v257
    %331 = vmatprep.subr.bf16.mxu0 0
    %332 = vmatpush1.bf16.msra.mxu0 %v258
    %333 = vmatprep.subr.bf16.mxu0 0
    %334 = vmatpush1.bf16.msra.mxu0 %v259
    %335 = vmatprep.subr.bf16.mxu0 0
    %336 = vmatpush1.bf16.msra.mxu0 %v260
    %337 = vmatprep.subr.bf16.mxu0 0
    %338 = vmatpush1.bf16.msra.mxu0 %v261
    %339 = vmatprep.subr.bf16.mxu0 0
    %340 = vmatpush1.bf16.msra.mxu0 %v262
    %341 = vmatprep.subr.bf16.mxu0 0
    %342 = vmatpush1.bf16.msra.mxu0 %v263
    %343 = vmatprep.subr.bf16.mxu0 0
    %344 = vmatpush1.bf16.msra.mxu0 %v264
    %345 = vmatprep.mubr.bf16.mxu0 %v114
    %346 = vmatmul.mubr.bf16.gmra.mrb[0].mxu0 %v107
    %v347 = vpop.f32.mrb[0].mxu0
    %v348 = vadd.f32 0.0, %v347
    %v349 = vpop.f32.mrb[0].mxu0
    %v350 = vpop.f32.mrb[0].mxu0
    %v351 = vpop.f32.mrb[0].mxu0
    %352 = vdwg.mxu0
    %353 = vmatprep.subr.bf16.mxu0 0
    %354 = vmatpush1.bf16.msra.mxu0 %v265
    %355 = vmatprep.subr.bf16.mxu0 0
    %356 = vmatpush1.bf16.msra.mxu0 %v266
    %357 = vmatprep.subr.bf16.mxu0 0
    %358 = vmatpush1.bf16.msra.mxu0 %v267
    %359 = vmatprep.subr.bf16.mxu0 0
    %360 = vmatpush1.bf16.msra.mxu0 %v268
    %361 = vmatprep.subr.bf16.mxu0 0
    %362 = vmatpush1.bf16.msra.mxu0 %v269
    %363 = vmatprep.subr.bf16.mxu0 0
    %364 = vmatpush1.bf16.msra.mxu0 %v270
    %365 = vmatprep.subr.bf16.mxu0 0
    %366 = vmatpush1.bf16.msra.mxu0 %v271
    %367 = vmatprep.subr.bf16.mxu0 0
    %368 = vmatpush1.bf16.msra.mxu0 %v272
    %369 = vmatprep.subr.bf16.mxu0 0
    %370 = vmatpush1.bf16.msra.mxu0 %v273
    %371 = vmatprep.subr.bf16.mxu0 0
    %372 = vmatpush1.bf16.msra.mxu0 %v274
    %373 = vmatprep.subr.bf16.mxu0 0
    %374 = vmatpush1.bf16.msra.mxu0 %v275
    %375 = vmatprep.subr.bf16.mxu0 0
    %376 = vmatpush1.bf16.msra.mxu0 %v276
    %377 = vmatprep.subr.bf16.mxu0 0
    %378 = vmatpush1.bf16.msra.mxu0 %v277
    %379 = vmatprep.subr.bf16.mxu0 0
    %380 = vmatpush1.bf16.msra.mxu0 %v278
    %381 = vmatprep.subr.bf16.mxu0 0
    %382 = vmatpush1.bf16.msra.mxu0 %v279
    %383 = vmatprep.subr.bf16.mxu0 0
    %384 = vmatpush1.bf16.msra.mxu0 %v280
    %385 = vmatprep.mubr.bf16.mxu0 %v116
    %386 = vmatmul.mubr.bf16.gmra.mrb[0].mxu0 %v115
    %v387 = vpop.f32.mrb[0].mxu0
    %v388 = vadd.f32 %v348, %v387
    %v389 = vpop.f32.mrb[0].mxu0
    %v390 = vpop.f32.mrb[0].mxu0
    %v391 = vpop.f32.mrb[0].mxu0
    %392 = vdwg.mxu0
    %393 = vst [vmem:[#allocation5] sm:$0x3] %v388
    // Predicated region
    $region14: #{simple_forward.1} parent=1 // pred_check
      _
    $region15: #{simple_forward.1} parent=1 // pred_check_branch
      %395 = sbr.rel (0) target = $region17
    $region16: #{simple_forward.1} parent=1 // pred_region
      %s397 = ssub.s32 32, 32
      %398 = vsyncadd [#allocation4], %s397
      %s400 = sshll.u32 [#allocation5], 4
      %s401 = int_to_ptr.vmem [resolvable:$true] %s400
      %403 = dma.vmem_to_hbm [thread:$0]  %s401, 32, %s2, [#allocation4]
    $region17: #{simple_forward.1} parent=1 // pred_fallthru
      _
    // Predicated region
    $region18: #{simple_forward.1} parent=1 // pred_check
      _
    $region19: #{simple_forward.1} parent=1 // pred_check_branch
      %405 = sbr.rel (0) target = $region21
    $region20: #{simple_forward.1} parent=1 // pred_region
      %406 = dma.done [#allocation4], 32
    $region21: #{simple_forward.1} parent=1 // pred_fallthru
      _
    %407 = vsyncpa [#allocation3], 1
    %408 = vsyncpa [#allocation4], 1

</llo_original>
